<compile_context>
chip_gen: v7x
topology: tpu7x:2x2x1
jax: 0.10.0
libtpu: 0.0.40
codegen_flags: <defaults>
</compile_context>

<pallas_src>
import jax
import jax.numpy as jnp
from jax.experimental import pallas as pl
from jax.experimental.pallas import tpu as pltpu


def _round_up(x, m):
    return ((x + m - 1) // m) * m


def simple_nn_kernel(x_ref, w1e_ref, b1_ref, w2_ref, b2_ref,
                     w25_ref, b25_ref, w3_ref, b3_ref,
                     w4_ref, b4_ref, w5_ref, b5_ref, out_ref):
    xt = x_ref[...]                                               # (K, TB) f32

    # fc1 applied to x.view(-1,1), re-flattened feature-major, fused with relu:
    #   h1[k*H+h, b] = relu(x[b,k]*w1[h] + b1[h])
    h1 = jnp.maximum(
        jnp.dot(w1e_ref[...], xt, preferred_element_type=jnp.float32)
        + b1_ref[...], 0.0)                                       # (K*H, TB)

    # fc2 -> relu   (256-deep contraction, full lane width N = TB)
    y = jnp.maximum(
        jnp.dot(w2_ref[...], h1, preferred_element_type=jnp.float32)
        + b2_ref[...], 0.0)                                       # (H, TB)
    # fc25 -> relu
    y = jnp.maximum(
        jnp.dot(w25_ref[...], y, preferred_element_type=jnp.float32)
        + b25_ref[...], 0.0)                                      # (H/2, TB)
    # fc3 -> relu
    y = jnp.maximum(
        jnp.dot(w3_ref[...], y, preferred_element_type=jnp.float32)
        + b3_ref[...], 0.0)                                       # (H/4, TB)
    # fc4 -> relu
    y = jnp.maximum(
        jnp.dot(w4_ref[...], y, preferred_element_type=jnp.float32)
        + b4_ref[...], 0.0)                                       # (H/8, TB)
    # fc5 (no activation)
    y = (jnp.dot(w5_ref[...], y, preferred_element_type=jnp.float32)
         + b5_ref[...])                                           # (1, TB)

    out_ref[...] = y.astype(out_ref.dtype)                        # lane-dense


def simple_nn_forward(x, params, *, block_b=4096):
    B, K = x.shape
    H = params["w1"].shape[0]

    # Expanded fc1 weight/bias, built once outside the kernel (pure JAX):
    #   w1_expand[k*H + h, k'] = w1[h, 0] if k' == k else 0   (= kron(I_K, w1))
    #   b1_col[k*H + h, 0]     = b1[h]
    w1_expand = jnp.kron(jnp.eye(K, dtype=x.dtype), params["w1"])   # (K*H, K)
    b1_col = jnp.tile(params["b1"].reshape(H, 1), (K, 1))           # (K*H, 1)

    def col(b):
        return b.reshape(-1, 1)

    # Feature-major activations: batch on the lane axis.
    xt = x.T                                                        # (K, B)

    # Batch tiling: tb multiple of 128 (lane width); >= 2 grid steps when the
    # batch allows so the "parallel" axis can use both TensorCores on v7x.
    lane = 128
    padded_b = _round_up(B, lane)
    tb_cap = min(_round_up(block_b, lane), padded_b)
    n_steps = pl.cdiv(padded_b, tb_cap)
    if n_steps < 2 and padded_b > lane:
        n_steps = 2
    tb = _round_up(pl.cdiv(padded_b, n_steps), lane)
    padded_b = tb * pl.cdiv(padded_b, tb)
    if padded_b != B:
        xt = jnp.pad(xt, ((0, 0), (0, padded_b - B)))   # zero pads, no NaNs
    grid = (padded_b // tb,)

    args = (xt, w1_expand, b1_col,
            params["w2"], col(params["b2"]),
            params["w25"], col(params["b25"]),
            params["w3"], col(params["b3"]),
            params["w4"], col(params["b4"]),
            params["w5"], col(params["b5"]))

    # x is tiled along the batch (lane) axis; weights/biases use a constant
    # index_map (stay resident across grid steps) and are single-buffered
    # since they are never re-fetched.
    in_specs = [pl.BlockSpec((K, tb), lambda i: (0, i))]
    in_specs += [pl.BlockSpec(a.shape, lambda i: (0, 0),
                              pipeline_mode=pl.Buffered(1))
                 for a in args[1:]]

    out = pl.pallas_call(
        simple_nn_kernel,
        out_shape=jax.ShapeDtypeStruct((1, padded_b), x.dtype),
        grid_spec=pltpu.PrefetchScalarGridSpec(
            num_scalar_prefetch=0,
            grid=grid,
            in_specs=in_specs,
            out_specs=pl.BlockSpec((1, tb), lambda i: (0, i)),
        ),
        compiler_params=pltpu.CompilerParams(
            dimension_semantics=("parallel",),
            vmem_limit_bytes=48 * 1024 * 1024),
    )(*args)
    return out[0, :B].reshape(B, 1)


def init_params(key, input_dim, hidden_dim):
    """Deterministic PyTorch-style uniform init; weights in (out, in) layout."""
    def linear(key, fan_in, fan_out):
        kw, kb = jax.random.split(key)
        bound = 1.0 / (fan_in ** 0.5)
        w = jax.random.uniform(kw, (fan_out, fan_in), jnp.float32, -bound, bound)
        b = jax.random.uniform(kb, (fan_out,), jnp.float32, -bound, bound)
        return w, b

    keys = jax.random.split(key, 6)
    h = hidden_dim
    w1,  b1  = linear(keys[0], 1, h)
    w2,  b2  = linear(keys[1], h * input_dim, h)
    w25, b25 = linear(keys[2], h, h // 2)
    w3,  b3  = linear(keys[3], h // 2, h // 4)
    w4,  b4  = linear(keys[4], h // 4, h // 8)
    w5,  b5  = linear(keys[5], h // 8, 1)
    return dict(w1=w1, b1=b1, w2=w2, b2=b2, w25=w25, b25=b25,
                w3=w3, b3=b3, w4=w4, b4=b4, w5=w5, b5=b5)


def reference_forward(x, p):
    """Pure-JAX reference mirroring the PyTorch forward exactly."""
    B = x.shape[0]
    y = x.reshape(-1, 1) @ p["w1"].T + p["b1"]
    y = jnp.maximum(y, 0.0).reshape(B, -1)
    y = jnp.maximum(y @ p["w2"].T + p["b2"], 0.0)
    y = jnp.maximum(y @ p["w25"].T + p["b25"], 0.0)
    y = jnp.maximum(y @ p["w3"].T + p["b3"], 0.0)
    y = jnp.maximum(y @ p["w4"].T + p["b4"], 0.0)
    y = y @ p["w5"].T + p["b5"]
    return y


if __name__ == "__main__":
    INPUT_DIM, HIDDEN_DIM = 8, 32

    key = jax.random.PRNGKey(0)
    kx, kx2, kp = jax.random.split(key, 3)
    params = init_params(kp, INPUT_DIM, HIDDEN_DIM)

    # Small-batch check (single grid step).
    B = 2
    x = jax.random.normal(kx, (B, INPUT_DIM), jnp.float32)
    out = jax.block_until_ready(simple_nn_forward(x, params))
    ref = reference_forward(x, params)
    assert out.shape == (B, 1)
    assert jnp.allclose(out, ref, atol=1e-3, rtol=1e-3), (out, ref)

    # Larger batch: exercises padding and the >=2-step parallel grid.
    B2 = 260
    x2 = jax.random.normal(kx2, (B2, INPUT_DIM), jnp.float32)
    out2 = jax.block_until_ready(simple_nn_forward(x2, params))
    ref2 = reference_forward(x2, params)
    assert out2.shape == (B2, 1)
    assert jnp.allclose(out2, ref2, atol=1e-3, rtol=1e-3)

    print("KERNEL_OK")
</pallas_src>

<mosaic_0001>
module attributes {stable_mosaic.version = 11 : i64} {
  func.func @simple_nn_kernel(%arg0: i32, %arg1: memref<8x128xf32, #tpu.memory_space<vmem>>, %arg2: memref<256x8xf32, #tpu.memory_space<vmem>>, %arg3: memref<256x1xf32, #tpu.memory_space<vmem>>, %arg4: memref<32x256xf32, #tpu.memory_space<vmem>>, %arg5: memref<32x1xf32, #tpu.memory_space<vmem>>, %arg6: memref<16x32xf32, #tpu.memory_space<vmem>>, %arg7: memref<16x1xf32, #tpu.memory_space<vmem>>, %arg8: memref<8x16xf32, #tpu.memory_space<vmem>>, %arg9: memref<8x1xf32, #tpu.memory_space<vmem>>, %arg10: memref<4x8xf32, #tpu.memory_space<vmem>>, %arg11: memref<4x1xf32, #tpu.memory_space<vmem>>, %arg12: memref<1x4xf32, #tpu.memory_space<vmem>>, %arg13: memref<1x1xf32, #tpu.memory_space<vmem>>, %arg14: memref<1x128xf32, #tpu.memory_space<vmem>>) attributes {dimension_semantics = [#tpu.dimension_semantics<parallel>], iteration_bounds = array<i64: 1>, scalar_prefetch = 0 : i64, scratch_operands = 0 : i64, tpu.core_type = #tpu.core_type<tc>, window_params = [{transform_indices = @transform_0, window_bounds = array<i64: 8, 128>}, {pipeline_mode = #tpu.pipeline_mode<synchronous>, transform_indices = @transform_1, window_bounds = array<i64: 256, 8>}, {pipeline_mode = #tpu.pipeline_mode<synchronous>, transform_indices = @transform_2, window_bounds = array<i64: 256, 1>}, {pipeline_mode = #tpu.pipeline_mode<synchronous>, transform_indices = @transform_3, window_bounds = array<i64: 32, 256>}, {pipeline_mode = #tpu.pipeline_mode<synchronous>, transform_indices = @transform_4, window_bounds = array<i64: 32, 1>}, {pipeline_mode = #tpu.pipeline_mode<synchronous>, transform_indices = @transform_5, window_bounds = array<i64: 16, 32>}, {pipeline_mode = #tpu.pipeline_mode<synchronous>, transform_indices = @transform_6, window_bounds = array<i64: 16, 1>}, {pipeline_mode = #tpu.pipeline_mode<synchronous>, transform_indices = @transform_7, window_bounds = array<i64: 8, 16>}, {pipeline_mode = #tpu.pipeline_mode<synchronous>, transform_indices = @transform_8, window_bounds = array<i64: 8, 1>}, {pipeline_mode = #tpu.pipeline_mode<synchronous>, transform_indices = @transform_9, window_bounds = array<i64: 4, 8>}, {pipeline_mode = #tpu.pipeline_mode<synchronous>, transform_indices = @transform_10, window_bounds = array<i64: 4, 1>}, {pipeline_mode = #tpu.pipeline_mode<synchronous>, transform_indices = @transform_11, window_bounds = array<i64: 1, 4>}, {pipeline_mode = #tpu.pipeline_mode<synchronous>, transform_indices = @transform_12, window_bounds = array<i64: 1, 1>}, {transform_indices = @transform_13, window_bounds = array<i64: 1, 128>}]} {
    %c0 = arith.constant 0 : index
    %c0_0 = arith.constant 0 : index
    %0 = vector.load %arg1[%c0, %c0_0] : memref<8x128xf32, #tpu.memory_space<vmem>>, vector<8x128xf32>
    %c0_1 = arith.constant 0 : index
    %c0_2 = arith.constant 0 : index
    %1 = vector.load %arg2[%c0_1, %c0_2] : memref<256x8xf32, #tpu.memory_space<vmem>>, vector<256x8xf32>
    %cst = arith.constant dense<0.000000e+00> : vector<256x128xf32>
    %2 = tpu.matmul %1, %0, %cst {dimension_numbers = #tpu.dot_dimension_numbers<[1], [0], [0], [1], [0, 0, 1, 1], [], []>} : vector<256x8xf32>, vector<8x128xf32>, vector<256x128xf32> -> vector<256x128xf32>
    %c0_3 = arith.constant 0 : index
    %c0_4 = arith.constant 0 : index
    %3 = vector.load %arg3[%c0_3, %c0_4] : memref<256x1xf32, #tpu.memory_space<vmem>>, vector<256x1xf32>
    %4 = vector.broadcast %3 : vector<256x1xf32> to vector<256x128xf32>
    %5 = arith.addf %2, %4 : vector<256x128xf32>
    %cst_5 = arith.constant 0.000000e+00 : f32
    %6 = vector.broadcast %cst_5 : f32 to vector<256x128xf32>
    %7 = arith.maximumf %5, %6 : vector<256x128xf32>
    %c0_6 = arith.constant 0 : index
    %c0_7 = arith.constant 0 : index
    %8 = vector.load %arg4[%c0_6, %c0_7] : memref<32x256xf32, #tpu.memory_space<vmem>>, vector<32x256xf32>
    %cst_8 = arith.constant dense<0.000000e+00> : vector<32x128xf32>
    %9 = tpu.matmul %8, %7, %cst_8 {dimension_numbers = #tpu.dot_dimension_numbers<[1], [0], [0], [1], [0, 0, 1, 1], [], []>} : vector<32x256xf32>, vector<256x128xf32>, vector<32x128xf32> -> vector<32x128xf32>
    %c0_9 = arith.constant 0 : index
    %c0_10 = arith.constant 0 : index
    %10 = vector.load %arg5[%c0_9, %c0_10] : memref<32x1xf32, #tpu.memory_space<vmem>>, vector<32x1xf32>
    %11 = vector.broadcast %10 : vector<32x1xf32> to vector<32x128xf32>
    %12 = arith.addf %9, %11 : vector<32x128xf32>
    %cst_11 = arith.constant 0.000000e+00 : f32
    %13 = vector.broadcast %cst_11 : f32 to vector<32x128xf32>
    %14 = arith.maximumf %12, %13 : vector<32x128xf32>
    %c0_12 = arith.constant 0 : index
    %c0_13 = arith.constant 0 : index
    %15 = vector.load %arg6[%c0_12, %c0_13] : memref<16x32xf32, #tpu.memory_space<vmem>>, vector<16x32xf32>
    %cst_14 = arith.constant dense<0.000000e+00> : vector<16x128xf32>
    %16 = tpu.matmul %15, %14, %cst_14 {dimension_numbers = #tpu.dot_dimension_numbers<[1], [0], [0], [1], [0, 0, 1, 1], [], []>} : vector<16x32xf32>, vector<32x128xf32>, vector<16x128xf32> -> vector<16x128xf32>
    %c0_15 = arith.constant 0 : index
    %c0_16 = arith.constant 0 : index
    %17 = vector.load %arg7[%c0_15, %c0_16] : memref<16x1xf32, #tpu.memory_space<vmem>>, vector<16x1xf32>
    %18 = vector.broadcast %17 : vector<16x1xf32> to vector<16x128xf32>
    %19 = arith.addf %16, %18 : vector<16x128xf32>
    %cst_17 = arith.constant 0.000000e+00 : f32
    %20 = vector.broadcast %cst_17 : f32 to vector<16x128xf32>
    %21 = arith.maximumf %19, %20 : vector<16x128xf32>
    %c0_18 = arith.constant 0 : index
    %c0_19 = arith.constant 0 : index
    %22 = vector.load %arg8[%c0_18, %c0_19] : memref<8x16xf32, #tpu.memory_space<vmem>>, vector<8x16xf32>
    %cst_20 = arith.constant dense<0.000000e+00> : vector<8x128xf32>
    %23 = tpu.matmul %22, %21, %cst_20 {dimension_numbers = #tpu.dot_dimension_numbers<[1], [0], [0], [1], [0, 0, 1, 1], [], []>} : vector<8x16xf32>, vector<16x128xf32>, vector<8x128xf32> -> vector<8x128xf32>
    %c0_21 = arith.constant 0 : index
    %c0_22 = arith.constant 0 : index
    %24 = vector.load %arg9[%c0_21, %c0_22] : memref<8x1xf32, #tpu.memory_space<vmem>>, vector<8x1xf32>
    %25 = vector.broadcast %24 : vector<8x1xf32> to vector<8x128xf32>
    %26 = arith.addf %23, %25 : vector<8x128xf32>
    %cst_23 = arith.constant 0.000000e+00 : f32
    %27 = vector.broadcast %cst_23 : f32 to vector<8x128xf32>
    %28 = arith.maximumf %26, %27 : vector<8x128xf32>
    %c0_24 = arith.constant 0 : index
    %c0_25 = arith.constant 0 : index
    %29 = vector.load %arg10[%c0_24, %c0_25] : memref<4x8xf32, #tpu.memory_space<vmem>>, vector<4x8xf32>
    %cst_26 = arith.constant dense<0.000000e+00> : vector<4x128xf32>
    %30 = tpu.matmul %29, %28, %cst_26 {dimension_numbers = #tpu.dot_dimension_numbers<[1], [0], [0], [1], [0, 0, 1, 1], [], []>} : vector<4x8xf32>, vector<8x128xf32>, vector<4x128xf32> -> vector<4x128xf32>
    %c0_27 = arith.constant 0 : index
    %c0_28 = arith.constant 0 : index
    %31 = vector.load %arg11[%c0_27, %c0_28] : memref<4x1xf32, #tpu.memory_space<vmem>>, vector<4x1xf32>
    %32 = vector.broadcast %31 : vector<4x1xf32> to vector<4x128xf32>
    %33 = arith.addf %30, %32 : vector<4x128xf32>
    %cst_29 = arith.constant 0.000000e+00 : f32
    %34 = vector.broadcast %cst_29 : f32 to vector<4x128xf32>
    %35 = arith.maximumf %33, %34 : vector<4x128xf32>
    %c0_30 = arith.constant 0 : index
    %c0_31 = arith.constant 0 : index
    %36 = vector.load %arg12[%c0_30, %c0_31] : memref<1x4xf32, #tpu.memory_space<vmem>>, vector<1x4xf32>
    %cst_32 = arith.constant dense<0.000000e+00> : vector<1x128xf32>
    %37 = tpu.matmul %36, %35, %cst_32 {dimension_numbers = #tpu.dot_dimension_numbers<[1], [0], [0], [1], [0, 0, 1, 1], [], []>} : vector<1x4xf32>, vector<4x128xf32>, vector<1x128xf32> -> vector<1x128xf32>
    %c0_33 = arith.constant 0 : index
    %c0_34 = arith.constant 0 : index
    %38 = vector.load %arg13[%c0_33, %c0_34] : memref<1x1xf32, #tpu.memory_space<vmem>>, vector<1x1xf32>
    %39 = vector.broadcast %38 : vector<1x1xf32> to vector<1x128xf32>
    %40 = arith.addf %37, %39 : vector<1x128xf32>
    %c0_35 = arith.constant 0 : index
    %c0_36 = arith.constant 0 : index
    %41 = vector.load %arg14[%c0_35, %c0_36] : memref<1x128xf32, #tpu.memory_space<vmem>>, vector<1x128xf32>
    tpu.vector_store %arg14[%c0_35, %c0_36], %40 {strides = array<i32>} : memref<1x128xf32, #tpu.memory_space<vmem>>, vector<1x128xf32>,
    return
  }
  func.func @transform_0(%arg0: i32) -> (i32, i32) {
    %c0_i32 = arith.constant 0 : i32
    %c0_i32_0 = arith.constant 0 : i32
    return %c0_i32, %arg0 : i32, i32
  }
  func.func @transform_1(%arg0: i32) -> (i32, i32) {
    %c0_i32 = arith.constant 0 : i32
    %c0_i32_0 = arith.constant 0 : i32
    %c0_i32_1 = arith.constant 0 : i32
    return %c0_i32, %c0_i32_0 : i32, i32
  }
  func.func @transform_2(%arg0: i32) -> (i32, i32) {
    %c0_i32 = arith.constant 0 : i32
    %c0_i32_0 = arith.constant 0 : i32
    %c0_i32_1 = arith.constant 0 : i32
    return %c0_i32, %c0_i32_0 : i32, i32
  }
  func.func @transform_3(%arg0: i32) -> (i32, i32) {
    %c0_i32 = arith.constant 0 : i32
    %c0_i32_0 = arith.constant 0 : i32
    %c0_i32_1 = arith.constant 0 : i32
    return %c0_i32, %c0_i32_0 : i32, i32
  }
  func.func @transform_4(%arg0: i32) -> (i32, i32) {
    %c0_i32 = arith.constant 0 : i32
    %c0_i32_0 = arith.constant 0 : i32
    %c0_i32_1 = arith.constant 0 : i32
    return %c0_i32, %c0_i32_0 : i32, i32
  }
  func.func @transform_5(%arg0: i32) -> (i32, i32) {
    %c0_i32 = arith.constant 0 : i32
    %c0_i32_0 = arith.constant 0 : i32
    %c0_i32_1 = arith.constant 0 : i32
    return %c0_i32, %c0_i32_0 : i32, i32
  }
  func.func @transform_6(%arg0: i32) -> (i32, i32) {
    %c0_i32 = arith.constant 0 : i32
    %c0_i32_0 = arith.constant 0 : i32
    %c0_i32_1 = arith.constant 0 : i32
    return %c0_i32, %c0_i32_0 : i32, i32
  }
  func.func @transform_7(%arg0: i32) -> (i32, i32) {
    %c0_i32 = arith.constant 0 : i32
    %c0_i32_0 = arith.constant 0 : i32
    %c0_i32_1 = arith.constant 0 : i32
    return %c0_i32, %c0_i32_0 : i32, i32
  }
  func.func @transform_8(%arg0: i32) -> (i32, i32) {
    %c0_i32 = arith.constant 0 : i32
    %c0_i32_0 = arith.constant 0 : i32
    %c0_i32_1 = arith.constant 0 : i32
    return %c0_i32, %c0_i32_0 : i32, i32
  }
  func.func @transform_9(%arg0: i32) -> (i32, i32) {
    %c0_i32 = arith.constant 0 : i32
    %c0_i32_0 = arith.constant 0 : i32
    %c0_i32_1 = arith.constant 0 : i32
    return %c0_i32, %c0_i32_0 : i32, i32
  }
  func.func @transform_10(%arg0: i32) -> (i32, i32) {
    %c0_i32 = arith.constant 0 : i32
    %c0_i32_0 = arith.constant 0 : i32
    %c0_i32_1 = arith.constant 0 : i32
    return %c0_i32, %c0_i32_0 : i32, i32
  }
  func.func @transform_11(%arg0: i32) -> (i32, i32) {
    %c0_i32 = arith.constant 0 : i32
    %c0_i32_0 = arith.constant 0 : i32
    %c0_i32_1 = arith.constant 0 : i32
    return %c0_i32, %c0_i32_0 : i32, i32
  }
  func.func @transform_12(%arg0: i32) -> (i32, i32) {
    %c0_i32 = arith.constant 0 : i32
    %c0_i32_0 = arith.constant 0 : i32
    %c0_i32_1 = arith.constant 0 : i32
    return %c0_i32, %c0_i32_0 : i32, i32
  }
  func.func @transform_13(%arg0: i32) -> (i32, i32) {
    %c0_i32 = arith.constant 0 : i32
    %c0_i32_0 = arith.constant 0 : i32
    return %c0_i32, %arg0 : i32, i32
  }
}

</mosaic_0001>

<llo_original>
// kernel: tpu_custom_call.1
$region0: #{tpu_custom_call.1}
  #allocation0 [shape = 'u32[]', space=smem, size = 0x4, offset = 0x4, fixed_abs, tag = 'smem constant byte address 0x4 - core index']
  #allocation1 [shape = 'u32[144,128]{1,0:T(1,128)}', space=vmem, size = 0x12000, scoped, tag = 'internal scratch']
  #allocation2 [shape = 'f32[1,1]{1,0:T(1,128)S(1)}', space=vmem, size = 0x200, scoped, tag = 'scoped memory for tpu_custom_call.1']
  %s0 = inlined_call_operand.vmem [shape: f32[8,128], index: 0, kind: input, shape index: {}]
  %s1 = inlined_call_operand.vmem [shape: f32[256,8], index: 1, kind: input, shape index: {}]
  %s2 = inlined_call_operand.vmem [shape: f32[256,1], index: 2, kind: input, shape index: {}]
  %s3 = inlined_call_operand.vmem [shape: f32[32,256], index: 3, kind: input, shape index: {}]
  %s4 = inlined_call_operand.vmem [shape: f32[32,1], index: 4, kind: input, shape index: {}]
  %s5 = inlined_call_operand.vmem [shape: f32[16,32], index: 5, kind: input, shape index: {}]
  %s6 = inlined_call_operand.vmem [shape: f32[16,1], index: 6, kind: input, shape index: {}]
  %s7 = inlined_call_operand.vmem [shape: f32[8,16], index: 7, kind: input, shape index: {}]
  %s8 = inlined_call_operand.vmem [shape: f32[8,1], index: 8, kind: input, shape index: {}]
  %s9 = inlined_call_operand.vmem [shape: f32[4,8], index: 9, kind: input, shape index: {}]
  %s10 = inlined_call_operand.vmem [shape: f32[4,1], index: 10, kind: input, shape index: {}]
  %s11 = inlined_call_operand.vmem [shape: f32[1,4], index: 11, kind: input, shape index: {}]
  %s12 = inlined_call_operand.<no memory space> [shape: f32[1,1], index: 12, kind: input, shape index: {}]
  %s13 = inlined_call_operand.hbm [shape: f32[1,128], index: 13, kind: output, shape index: {}]
  %s14 = sld [smem:[#allocation0]]
  $region62: #{tpu_custom_call.1} parent=0
    _
  %s16 = ssub.s32 1, %s14
  %s17 = scalar_select 0, %s16, %s14
  %v18 = vstv %s12
  %19 = vst [vmem:[#allocation2] sm:$0x1] %v18
  $region1: #{tpu_custom_call.1} parent=0
    #allocation3 [shape = 'u8[512]{0}', space=vmem, size = 0x400, scoped, tag = 'output window, operand 0, single buffered']
    #allocation4 [shape = 's32[1]{0}', space=sflag, size = 0x4, scoped, tag = 'scoped memory for tpu_custom_call.1']
    %20 = vsyncpa [#allocation4], 0
    // Predicated region
    $region2: #{tpu_custom_call.1} parent=1 // pred_check
      _
    $region3: #{tpu_custom_call.1} parent=1 // pred_check_branch
      %22 = sbr.rel (0) target = $region5
    $region4: #{tpu_custom_call.1} parent=1 // pred_region
      _
    $region5: #{tpu_custom_call.1} parent=1 // pred_fallthru
      _
    // Predicated region
    $region6: #{tpu_custom_call.1} parent=1 // pred_check
      _
    $region7: #{tpu_custom_call.1} parent=1 // pred_check_branch
      %24 = sbr.rel (0) target = $region9
    $region8: #{tpu_custom_call.1} parent=1 // pred_region
      _
    $region9: #{tpu_custom_call.1} parent=1 // pred_fallthru
      _
    // Predicated region
    $region10: #{tpu_custom_call.1} parent=1 // pred_check
      _
    $region11: #{tpu_custom_call.1} parent=1 // pred_check_branch
      %26 = sbr.rel (0) target = $region13
    $region12: #{tpu_custom_call.1} parent=1 // pred_region
      _
    $region13: #{tpu_custom_call.1} parent=1 // pred_fallthru
      _
    // Predicated region
    $region14: #{tpu_custom_call.1} parent=1 // pred_check
      _
    $region15: #{tpu_custom_call.1} parent=1 // pred_check_branch
      %28 = sbr.rel (0) target = $region17
    $region16: #{tpu_custom_call.1} parent=1 // pred_region
      _
    $region17: #{tpu_custom_call.1} parent=1 // pred_fallthru
      _
    // Predicated region
    $region18: #{tpu_custom_call.1} parent=1 // pred_check
      _
    $region19: #{tpu_custom_call.1} parent=1 // pred_check_branch
      %30 = sbr.rel (0) target = $region21
    $region20: #{tpu_custom_call.1} parent=1 // pred_region
      _
    $region21: #{tpu_custom_call.1} parent=1 // pred_fallthru
      _
    // Predicated region
    $region22: #{tpu_custom_call.1} parent=1 // pred_check
      _
    $region23: #{tpu_custom_call.1} parent=1 // pred_check_branch
      %32 = sbr.rel (0) target = $region25
    $region24: #{tpu_custom_call.1} parent=1 // pred_region
      _
    $region25: #{tpu_custom_call.1} parent=1 // pred_fallthru
      _
    // Predicated region
    $region26: #{tpu_custom_call.1} parent=1 // pred_check
      _
    $region27: #{tpu_custom_call.1} parent=1 // pred_check_branch
      %34 = sbr.rel (0) target = $region29
    $region28: #{tpu_custom_call.1} parent=1 // pred_region
      _
    $region29: #{tpu_custom_call.1} parent=1 // pred_fallthru
      _
    // Predicated region
    $region30: #{tpu_custom_call.1} parent=1 // pred_check
      _
    $region31: #{tpu_custom_call.1} parent=1 // pred_check_branch
      %36 = sbr.rel (0) target = $region33
    $region32: #{tpu_custom_call.1} parent=1 // pred_region
      _
    $region33: #{tpu_custom_call.1} parent=1 // pred_fallthru
      _
    // Predicated region
    $region34: #{tpu_custom_call.1} parent=1 // pred_check
      _
    $region35: #{tpu_custom_call.1} parent=1 // pred_check_branch
      %38 = sbr.rel (0) target = $region37
    $region36: #{tpu_custom_call.1} parent=1 // pred_region
      _
    $region37: #{tpu_custom_call.1} parent=1 // pred_fallthru
      _
    // Predicated region
    $region38: #{tpu_custom_call.1} parent=1 // pred_check
      _
    $region39: #{tpu_custom_call.1} parent=1 // pred_check_branch
      %40 = sbr.rel (0) target = $region41
    $region40: #{tpu_custom_call.1} parent=1 // pred_region
      _
    $region41: #{tpu_custom_call.1} parent=1 // pred_fallthru
      _
    // Predicated region
    $region42: #{tpu_custom_call.1} parent=1 // pred_check
      _
    $region43: #{tpu_custom_call.1} parent=1 // pred_check_branch
      %42 = sbr.rel (0) target = $region45
    $region44: #{tpu_custom_call.1} parent=1 // pred_region
      _
    $region45: #{tpu_custom_call.1} parent=1 // pred_fallthru
      _
    // Predicated region
    $region46: #{tpu_custom_call.1} parent=1 // pred_check
      _
    $region47: #{tpu_custom_call.1} parent=1 // pred_check_branch
      %44 = sbr.rel (0) target = $region49
    $region48: #{tpu_custom_call.1} parent=1 // pred_region
      _
    $region49: #{tpu_custom_call.1} parent=1 // pred_fallthru
      _
    // Predicated region
    $region50: #{tpu_custom_call.1} parent=1 // pred_check
      _
    $region51: #{tpu_custom_call.1} parent=1 // pred_check_branch
      %46 = sbr.rel (0) target = $region53
    $region52: #{tpu_custom_call.1} parent=1 // pred_region
      _
    $region53: #{tpu_custom_call.1} parent=1 // pred_fallthru
      _
    %v47 = vld [vmem:[%s0] sm:$0xff]
    %v48 = vld [vmem:[%s1] sm:$0xff]
    %v49 = vld [vmem:[%s1 + $0x8] sm:$0xff]
    %v50 = vld [vmem:[%s1 + $0x10] sm:$0xff]
    %v51 = vld [vmem:[%s1 + $0x18] sm:$0xff]
    %v52 = vld [vmem:[%s1 + $0x20] sm:$0xff]
    %v53 = vld [vmem:[%s1 + $0x28] sm:$0xff]
    %v54 = vld [vmem:[%s1 + $0x30] sm:$0xff]
    %v55 = vld [vmem:[%s1 + $0x38] sm:$0xff]
    %v56 = vld [vmem:[%s1 + $0x40] sm:$0xff]
    %v57 = vld [vmem:[%s1 + $0x48] sm:$0xff]
    %v58 = vld [vmem:[%s1 + $0x50] sm:$0xff]
    %v59 = vld [vmem:[%s1 + $0x58] sm:$0xff]
    %v60 = vld [vmem:[%s1 + $0x60] sm:$0xff]
    %v61 = vld [vmem:[%s1 + $0x68] sm:$0xff]
    %v62 = vld [vmem:[%s1 + $0x70] sm:$0xff]
    %v63 = vld [vmem:[%s1 + $0x78] sm:$0xff]
    %v64 = vld [vmem:[%s1 + $0x80] sm:$0xff]
    %v65 = vld [vmem:[%s1 + $0x88] sm:$0xff]
    %v66 = vld [vmem:[%s1 + $0x90] sm:$0xff]
    %v67 = vld [vmem:[%s1 + $0x98] sm:$0xff]
    %v68 = vld [vmem:[%s1 + $0xa0] sm:$0xff]
    %v69 = vld [vmem:[%s1 + $0xa8] sm:$0xff]
    %v70 = vld [vmem:[%s1 + $0xb0] sm:$0xff]
    %v71 = vld [vmem:[%s1 + $0xb8] sm:$0xff]
    %v72 = vld [vmem:[%s1 + $0xc0] sm:$0xff]
    %v73 = vld [vmem:[%s1 + $0xc8] sm:$0xff]
    %v74 = vld [vmem:[%s1 + $0xd0] sm:$0xff]
    %v75 = vld [vmem:[%s1 + $0xd8] sm:$0xff]
    %v76 = vld [vmem:[%s1 + $0xe0] sm:$0xff]
    %v77 = vld [vmem:[%s1 + $0xe8] sm:$0xff]
    %v78 = vld [vmem:[%s1 + $0xf0] sm:$0xff]
    %v79 = vld [vmem:[%s1 + $0xf8] sm:$0xff]
    %v80 = vld [vmem:[%s2] sm:$0xff]
    %v81 = vld [vmem:[%s2 + $0x8] sm:$0xff]
    %v82 = vld [vmem:[%s2 + $0x10] sm:$0xff]
    %v83 = vld [vmem:[%s2 + $0x18] sm:$0xff]
    %v84 = vld [vmem:[%s2 + $0x20] sm:$0xff]
    %v85 = vld [vmem:[%s2 + $0x28] sm:$0xff]
    %v86 = vld [vmem:[%s2 + $0x30] sm:$0xff]
    %v87 = vld [vmem:[%s2 + $0x38] sm:$0xff]
    %v88 = vld [vmem:[%s2 + $0x40] sm:$0xff]
    %v89 = vld [vmem:[%s2 + $0x48] sm:$0xff]
    %v90 = vld [vmem:[%s2 + $0x50] sm:$0xff]
    %v91 = vld [vmem:[%s2 + $0x58] sm:$0xff]
    %v92 = vld [vmem:[%s2 + $0x60] sm:$0xff]
    %v93 = vld [vmem:[%s2 + $0x68] sm:$0xff]
    %v94 = vld [vmem:[%s2 + $0x70] sm:$0xff]
    %v95 = vld [vmem:[%s2 + $0x78] sm:$0xff]
    %v96 = vld [vmem:[%s2 + $0x80] sm:$0xff]
    %v97 = vld [vmem:[%s2 + $0x88] sm:$0xff]
    %v98 = vld [vmem:[%s2 + $0x90] sm:$0xff]
    %v99 = vld [vmem:[%s2 + $0x98] sm:$0xff]
    %v100 = vld [vmem:[%s2 + $0xa0] sm:$0xff]
    %v101 = vld [vmem:[%s2 + $0xa8] sm:$0xff]
    %v102 = vld [vmem:[%s2 + $0xb0] sm:$0xff]
    %v103 = vld [vmem:[%s2 + $0xb8] sm:$0xff]
    %v104 = vld [vmem:[%s2 + $0xc0] sm:$0xff]
    %v105 = vld [vmem:[%s2 + $0xc8] sm:$0xff]
    %v106 = vld [vmem:[%s2 + $0xd0] sm:$0xff]
    %v107 = vld [vmem:[%s2 + $0xd8] sm:$0xff]
    %v108 = vld [vmem:[%s2 + $0xe0] sm:$0xff]
    %v109 = vld [vmem:[%s2 + $0xe8] sm:$0xff]
    %v110 = vld [vmem:[%s2 + $0xf0] sm:$0xff]
    %v111 = vld [vmem:[%s2 + $0xf8] sm:$0xff]
    %113 = vset.pattern.permute.xlu0 0
    %114 = vperm.xlu0 %113, %v80
    %v115 = vpop.permute.xlu0 %114
    %118 = vset.pattern.permute.xlu0 0
    %119 = vperm.xlu0 %118, %v81
    %v120 = vpop.permute.xlu0 %119
    %123 = vset.pattern.permute.xlu0 0
    %124 = vperm.xlu0 %123, %v82
    %v125 = vpop.permute.xlu0 %124
    %128 = vset.pattern.permute.xlu0 0
    %129 = vperm.xlu0 %128, %v83
    %v130 = vpop.permute.xlu0 %129
    %133 = vset.pattern.permute.xlu0 0
    %134 = vperm.xlu0 %133, %v84
    %v135 = vpop.permute.xlu0 %134
    %138 = vset.pattern.permute.xlu0 0
    %139 = vperm.xlu0 %138, %v85
    %v140 = vpop.permute.xlu0 %139
    %143 = vset.pattern.permute.xlu0 0
    %144 = vperm.xlu0 %143, %v86
    %v145 = vpop.permute.xlu0 %144
    %148 = vset.pattern.permute.xlu0 0
    %149 = vperm.xlu0 %148, %v87
    %v150 = vpop.permute.xlu0 %149
    %153 = vset.pattern.permute.xlu0 0
    %154 = vperm.xlu0 %153, %v88
    %v155 = vpop.permute.xlu0 %154
    %158 = vset.pattern.permute.xlu0 0
    %159 = vperm.xlu0 %158, %v89
    %v160 = vpop.permute.xlu0 %159
    %163 = vset.pattern.permute.xlu0 0
    %164 = vperm.xlu0 %163, %v90
    %v165 = vpop.permute.xlu0 %164
    %168 = vset.pattern.permute.xlu0 0
    %169 = vperm.xlu0 %168, %v91
    %v170 = vpop.permute.xlu0 %169
    %173 = vset.pattern.permute.xlu0 0
    %174 = vperm.xlu0 %173, %v92
    %v175 = vpop.permute.xlu0 %174
    %178 = vset.pattern.permute.xlu0 0
    %179 = vperm.xlu0 %178, %v93
    %v180 = vpop.permute.xlu0 %179
    %183 = vset.pattern.permute.xlu0 0
    %184 = vperm.xlu0 %183, %v94
    %v185 = vpop.permute.xlu0 %184
    %188 = vset.pattern.permute.xlu0 0
    %189 = vperm.xlu0 %188, %v95
    %v190 = vpop.permute.xlu0 %189
    %193 = vset.pattern.permute.xlu0 0
    %194 = vperm.xlu0 %193, %v96
    %v195 = vpop.permute.xlu0 %194
    %198 = vset.pattern.permute.xlu0 0
    %199 = vperm.xlu0 %198, %v97
    %v200 = vpop.permute.xlu0 %199
    %203 = vset.pattern.permute.xlu0 0
    %204 = vperm.xlu0 %203, %v98
    %v205 = vpop.permute.xlu0 %204
    %208 = vset.pattern.permute.xlu0 0
    %209 = vperm.xlu0 %208, %v99
    %v210 = vpop.permute.xlu0 %209
    %213 = vset.pattern.permute.xlu0 0
    %214 = vperm.xlu0 %213, %v100
    %v215 = vpop.permute.xlu0 %214
    %218 = vset.pattern.permute.xlu0 0
    %219 = vperm.xlu0 %218, %v101
    %v220 = vpop.permute.xlu0 %219
    %223 = vset.pattern.permute.xlu0 0
    %224 = vperm.xlu0 %223, %v102
    %v225 = vpop.permute.xlu0 %224
    %228 = vset.pattern.permute.xlu0 0
    %229 = vperm.xlu0 %228, %v103
    %v230 = vpop.permute.xlu0 %229
    %233 = vset.pattern.permute.xlu0 0
    %234 = vperm.xlu0 %233, %v104
    %v235 = vpop.permute.xlu0 %234
    %238 = vset.pattern.permute.xlu0 0
    %239 = vperm.xlu0 %238, %v105
    %v240 = vpop.permute.xlu0 %239
    %243 = vset.pattern.permute.xlu0 0
    %244 = vperm.xlu0 %243, %v106
    %v245 = vpop.permute.xlu0 %244
    %248 = vset.pattern.permute.xlu0 0
    %249 = vperm.xlu0 %248, %v107
    %v250 = vpop.permute.xlu0 %249
    %253 = vset.pattern.permute.xlu0 0
    %254 = vperm.xlu0 %253, %v108
    %v255 = vpop.permute.xlu0 %254
    %258 = vset.pattern.permute.xlu0 0
    %259 = vperm.xlu0 %258, %v109
    %v260 = vpop.permute.xlu0 %259
    %263 = vset.pattern.permute.xlu0 0
    %264 = vperm.xlu0 %263, %v110
    %v265 = vpop.permute.xlu0 %264
    %268 = vset.pattern.permute.xlu0 0
    %269 = vperm.xlu0 %268, %v111
    %v270 = vpop.permute.xlu0 %269
    %vm272 = vcmask 64512
    %v274 = vsel %vm272, %v48, 0
    %v277 = vsel %vm272, %v49, 0
    %v280 = vsel %vm272, %v50, 0
    %v283 = vsel %vm272, %v51, 0
    %v286 = vsel %vm272, %v52, 0
    %v289 = vsel %vm272, %v53, 0
    %v292 = vsel %vm272, %v54, 0
    %v295 = vsel %vm272, %v55, 0
    %v298 = vsel %vm272, %v56, 0
    %v301 = vsel %vm272, %v57, 0
    %v304 = vsel %vm272, %v58, 0
    %v307 = vsel %vm272, %v59, 0
    %v310 = vsel %vm272, %v60, 0
    %v313 = vsel %vm272, %v61, 0
    %v316 = vsel %vm272, %v62, 0
    %v319 = vsel %vm272, %v63, 0
    %v322 = vsel %vm272, %v64, 0
    %v325 = vsel %vm272, %v65, 0
    %v328 = vsel %vm272, %v66, 0
    %v331 = vsel %vm272, %v67, 0
    %v334 = vsel %vm272, %v68, 0
    %v337 = vsel %vm272, %v69, 0
    %v340 = vsel %vm272, %v70, 0
    %v343 = vsel %vm272, %v71, 0
    %v346 = vsel %vm272, %v72, 0
    %v349 = vsel %vm272, %v73, 0
    %v352 = vsel %vm272, %v74, 0
    %v355 = vsel %vm272, %v75, 0
    %v358 = vsel %vm272, %v76, 0
    %v361 = vsel %vm272, %v77, 0
    %v364 = vsel %vm272, %v78, 0
    %v367 = vsel %vm272, %v79, 0
    %369 = vmatprep.subr.mxu0 0.0
    %370 = vmatpush1.msra.mxu0 %v47
    %371 = vmatprep.subr.mxu0 0.0
    %372 = vmatpush1.msra.mxu0 0.0
    %373 = vmatprep.subr.mxu0 0.0
    %374 = vmatpush1.msra.mxu0 0.0
    %375 = vmatprep.subr.mxu0 0.0
    %376 = vmatpush1.msra.mxu0 0.0
    %377 = vmatprep.subr.mxu0 0.0
    %378 = vmatpush1.msra.mxu0 0.0
    %379 = vmatprep.subr.mxu0 0.0
    %380 = vmatpush1.msra.mxu0 0.0
    %381 = vmatprep.subr.mxu0 0.0
    %382 = vmatpush1.msra.mxu0 0.0
    %383 = vmatprep.subr.mxu0 0.0
    %384 = vmatpush1.msra.mxu0 0.0
    %385 = vmatprep.subr.mxu0 0.0
    %386 = vmatpush1.msra.mxu0 0.0
    %387 = vmatprep.subr.mxu0 0.0
    %388 = vmatpush1.msra.mxu0 0.0
    %389 = vmatprep.subr.mxu0 0.0
    %390 = vmatpush1.msra.mxu0 0.0
    %391 = vmatprep.subr.mxu0 0.0
    %392 = vmatpush1.msra.mxu0 0.0
    %393 = vmatprep.subr.mxu0 0.0
    %394 = vmatpush1.msra.mxu0 0.0
    %395 = vmatprep.subr.mxu0 0.0
    %396 = vmatpush1.msra.mxu0 0.0
    %397 = vmatprep.subr.mxu0 0.0
    %398 = vmatpush1.msra.mxu0 0.0
    %399 = vmatprep.subr.mxu0 0.0
    %400 = vmatpush1.msra.mxu0 0.0
    %401 = vmatprep.subr.mxu0 0.0
    %402 = vmatpush1.msra.mxu0 0.0
    %403 = vmatprep.subr.mxu0 0.0
    %404 = vmatpush1.msra.mxu0 0.0
    %405 = vmatprep.subr.mxu0 0.0
    %406 = vmatpush1.msra.mxu0 0.0
    %407 = vmatprep.subr.mxu0 0.0
    %408 = vmatpush1.msra.mxu0 0.0
    %409 = vmatprep.subr.mxu0 0.0
    %410 = vmatpush1.msra.mxu0 0.0
    %411 = vmatprep.subr.mxu0 0.0
    %412 = vmatpush1.msra.mxu0 0.0
    %413 = vmatprep.subr.mxu0 0.0
    %414 = vmatpush1.msra.mxu0 0.0
    %415 = vmatprep.subr.mxu0 0.0
    %416 = vmatpush1.msra.mxu0 0.0
    %417 = vmatprep.subr.mxu0 0.0
    %418 = vmatpush1.msra.mxu0 0.0
    %419 = vmatprep.subr.mxu0 0.0
    %420 = vmatpush1.msra.mxu0 0.0
    %421 = vmatprep.subr.mxu0 0.0
    %422 = vmatpush1.msra.mxu0 0.0
    %423 = vmatprep.subr.mxu0 0.0
    %424 = vmatpush1.msra.mxu0 0.0
    %425 = vmatprep.subr.mxu0 0.0
    %426 = vmatpush1.msra.mxu0 0.0
    %427 = vmatprep.subr.mxu0 0.0
    %428 = vmatpush1.msra.mxu0 0.0
    %429 = vmatprep.subr.mxu0 0.0
    %430 = vmatpush1.msra.mxu0 0.0
    %431 = vmatprep.subr.mxu0 0.0
    %432 = vmatpush1.msra.mxu0 0.0
    %433 = vmatprep.mubr.f32.mxu0 0.0
    %434 = vmatmul.mubr.f32.gmra.mrb[0].mxu0 %v274
    %v435 = vpop.f32.mrb[0].mxu0
    %v436 = vadd.f32 %v115, %v435
    %v437 = vpop.f32.mrb[0].mxu0
    %438 = vmatprep.mubr.f32.mxu0 0.0
    %439 = vmatmul.mubr.f32.gmra.mrb[0].mxu0 %v277
    %v440 = vpop.f32.mrb[0].mxu0
    %v441 = vadd.f32 %v120, %v440
    %v442 = vpop.f32.mrb[0].mxu0
    %443 = vmatprep.mubr.f32.mxu0 0.0
    %444 = vmatmul.mubr.f32.gmra.mrb[0].mxu0 %v280
    %v445 = vpop.f32.mrb[0].mxu0
    %v446 = vadd.f32 %v125, %v445
    %v447 = vpop.f32.mrb[0].mxu0
    %448 = vmatprep.mubr.f32.mxu0 0.0
    %449 = vmatmul.mubr.f32.gmra.mrb[0].mxu0 %v283
    %v450 = vpop.f32.mrb[0].mxu0
    %v451 = vadd.f32 %v130, %v450
    %v452 = vpop.f32.mrb[0].mxu0
    %453 = vmatprep.mubr.f32.mxu0 0.0
    %454 = vmatmul.mubr.f32.gmra.mrb[0].mxu0 %v286
    %v455 = vpop.f32.mrb[0].mxu0
    %v456 = vadd.f32 %v135, %v455
    %v457 = vpop.f32.mrb[0].mxu0
    %458 = vmatprep.mubr.f32.mxu0 0.0
    %459 = vmatmul.mubr.f32.gmra.mrb[0].mxu0 %v289
    %v460 = vpop.f32.mrb[0].mxu0
    %v461 = vadd.f32 %v140, %v460
    %v462 = vpop.f32.mrb[0].mxu0
    %463 = vmatprep.mubr.f32.mxu0 0.0
    %464 = vmatmul.mubr.f32.gmra.mrb[0].mxu0 %v292
    %v465 = vpop.f32.mrb[0].mxu0
    %v466 = vadd.f32 %v145, %v465
    %v467 = vpop.f32.mrb[0].mxu0
    %468 = vmatprep.mubr.f32.mxu0 0.0
    %469 = vmatmul.mubr.f32.gmra.mrb[0].mxu0 %v295
    %v470 = vpop.f32.mrb[0].mxu0
    %v471 = vadd.f32 %v150, %v470
    %v472 = vpop.f32.mrb[0].mxu0
    %473 = vmatprep.mubr.f32.mxu0 0.0
    %474 = vmatmul.mubr.f32.gmra.mrb[0].mxu0 %v298
    %v475 = vpop.f32.mrb[0].mxu0
    %v476 = vadd.f32 %v155, %v475
    %v477 = vpop.f32.mrb[0].mxu0
    %478 = vmatprep.mubr.f32.mxu0 0.0
    %479 = vmatmul.mubr.f32.gmra.mrb[0].mxu0 %v301
    %v480 = vpop.f32.mrb[0].mxu0
    %v481 = vadd.f32 %v160, %v480
    %v482 = vpop.f32.mrb[0].mxu0
    %483 = vmatprep.mubr.f32.mxu0 0.0
    %484 = vmatmul.mubr.f32.gmra.mrb[0].mxu0 %v304
    %v485 = vpop.f32.mrb[0].mxu0
    %v486 = vadd.f32 %v165, %v485
    %v487 = vpop.f32.mrb[0].mxu0
    %488 = vmatprep.mubr.f32.mxu0 0.0
    %489 = vmatmul.mubr.f32.gmra.mrb[0].mxu0 %v307
    %v490 = vpop.f32.mrb[0].mxu0
    %v491 = vadd.f32 %v170, %v490
    %v492 = vpop.f32.mrb[0].mxu0
    %493 = vmatprep.mubr.f32.mxu0 0.0
    %494 = vmatmul.mubr.f32.gmra.mrb[0].mxu0 %v310
    %v495 = vpop.f32.mrb[0].mxu0
    %v496 = vadd.f32 %v175, %v495
    %v497 = vpop.f32.mrb[0].mxu0
    %498 = vmatprep.mubr.f32.mxu0 0.0
    %499 = vmatmul.mubr.f32.gmra.mrb[0].mxu0 %v313
    %v500 = vpop.f32.mrb[0].mxu0
    %v501 = vadd.f32 %v180, %v500
    %v502 = vpop.f32.mrb[0].mxu0
    %503 = vmatprep.mubr.f32.mxu0 0.0
    %504 = vmatmul.mubr.f32.gmra.mrb[0].mxu0 %v316
    %v505 = vpop.f32.mrb[0].mxu0
    %v506 = vadd.f32 %v185, %v505
    %v507 = vpop.f32.mrb[0].mxu0
    %508 = vmatprep.mubr.f32.mxu0 0.0
    %509 = vmatmul.mubr.f32.gmra.mrb[0].mxu0 %v319
    %v510 = vpop.f32.mrb[0].mxu0
    %v511 = vadd.f32 %v190, %v510
    %v512 = vpop.f32.mrb[0].mxu0
    %513 = vmatprep.mubr.f32.mxu0 0.0
    %514 = vmatmul.mubr.f32.gmra.mrb[0].mxu0 %v322
    %v515 = vpop.f32.mrb[0].mxu0
    %v516 = vadd.f32 %v195, %v515
    %v517 = vpop.f32.mrb[0].mxu0
    %518 = vmatprep.mubr.f32.mxu0 0.0
    %519 = vmatmul.mubr.f32.gmra.mrb[0].mxu0 %v325
    %v520 = vpop.f32.mrb[0].mxu0
    %v521 = vadd.f32 %v200, %v520
    %v522 = vpop.f32.mrb[0].mxu0
    %523 = vmatprep.mubr.f32.mxu0 0.0
    %524 = vmatmul.mubr.f32.gmra.mrb[0].mxu0 %v328
    %v525 = vpop.f32.mrb[0].mxu0
    %v526 = vadd.f32 %v205, %v525
    %v527 = vpop.f32.mrb[0].mxu0
    %528 = vmatprep.mubr.f32.mxu0 0.0
    %529 = vmatmul.mubr.f32.gmra.mrb[0].mxu0 %v331
    %v530 = vpop.f32.mrb[0].mxu0
    %v531 = vadd.f32 %v210, %v530
    %v532 = vpop.f32.mrb[0].mxu0
    %533 = vmatprep.mubr.f32.mxu0 0.0
    %534 = vmatmul.mubr.f32.gmra.mrb[0].mxu0 %v334
    %v535 = vpop.f32.mrb[0].mxu0
    %v536 = vadd.f32 %v215, %v535
    %v537 = vpop.f32.mrb[0].mxu0
    %538 = vmatprep.mubr.f32.mxu0 0.0
    %539 = vmatmul.mubr.f32.gmra.mrb[0].mxu0 %v337
    %v540 = vpop.f32.mrb[0].mxu0
    %v541 = vadd.f32 %v220, %v540
    %v542 = vpop.f32.mrb[0].mxu0
    %543 = vmatprep.mubr.f32.mxu0 0.0
    %544 = vmatmul.mubr.f32.gmra.mrb[0].mxu0 %v340
    %v545 = vpop.f32.mrb[0].mxu0
    %v546 = vadd.f32 %v225, %v545
    %v547 = vpop.f32.mrb[0].mxu0
    %548 = vmatprep.mubr.f32.mxu0 0.0
    %549 = vmatmul.mubr.f32.gmra.mrb[0].mxu0 %v343
    %v550 = vpop.f32.mrb[0].mxu0
    %v551 = vadd.f32 %v230, %v550
    %v552 = vpop.f32.mrb[0].mxu0
    %553 = vmatprep.mubr.f32.mxu0 0.0
    %554 = vmatmul.mubr.f32.gmra.mrb[0].mxu0 %v346
    %v555 = vpop.f32.mrb[0].mxu0
    %v556 = vadd.f32 %v235, %v555
    %v557 = vpop.f32.mrb[0].mxu0
    %558 = vmatprep.mubr.f32.mxu0 0.0
    %559 = vmatmul.mubr.f32.gmra.mrb[0].mxu0 %v349
    %v560 = vpop.f32.mrb[0].mxu0
    %v561 = vadd.f32 %v240, %v560
    %v562 = vpop.f32.mrb[0].mxu0
    %563 = vmatprep.mubr.f32.mxu0 0.0
    %564 = vmatmul.mubr.f32.gmra.mrb[0].mxu0 %v352
    %v565 = vpop.f32.mrb[0].mxu0
    %v566 = vadd.f32 %v245, %v565
    %v567 = vpop.f32.mrb[0].mxu0
    %568 = vmatprep.mubr.f32.mxu0 0.0
    %569 = vmatmul.mubr.f32.gmra.mrb[0].mxu0 %v355
    %v570 = vpop.f32.mrb[0].mxu0
    %v571 = vadd.f32 %v250, %v570
    %v572 = vpop.f32.mrb[0].mxu0
    %573 = vmatprep.mubr.f32.mxu0 0.0
    %574 = vmatmul.mubr.f32.gmra.mrb[0].mxu0 %v358
    %v575 = vpop.f32.mrb[0].mxu0
    %v576 = vadd.f32 %v255, %v575
    %v577 = vpop.f32.mrb[0].mxu0
    %578 = vmatprep.mubr.f32.mxu0 0.0
    %579 = vmatmul.mubr.f32.gmra.mrb[0].mxu0 %v361
    %v580 = vpop.f32.mrb[0].mxu0
    %v581 = vadd.f32 %v260, %v580
    %v582 = vpop.f32.mrb[0].mxu0
    %583 = vmatprep.mubr.f32.mxu0 0.0
    %584 = vmatmul.mubr.f32.gmra.mrb[0].mxu0 %v364
    %v585 = vpop.f32.mrb[0].mxu0
    %v586 = vadd.f32 %v265, %v585
    %v587 = vpop.f32.mrb[0].mxu0
    %588 = vmatprep.mubr.f32.mxu0 0.0
    %589 = vmatmul.mubr.f32.gmra.mrb[0].mxu0 %v367
    %v590 = vpop.f32.mrb[0].mxu0
    %v591 = vadd.f32 %v270, %v590
    %v592 = vpop.f32.mrb[0].mxu0
    %593 = vdwg.mxu0
    %v594 = vmax.f32 %v436, 0.0
    %v595 = vmax.f32 %v441, 0.0
    %v596 = vmax.f32 %v446, 0.0
    %v597 = vmax.f32 %v451, 0.0
    %v598 = vmax.f32 %v456, 0.0
    %v599 = vmax.f32 %v461, 0.0
    %v600 = vmax.f32 %v466, 0.0
    %v601 = vmax.f32 %v471, 0.0
    %v602 = vmax.f32 %v476, 0.0
    %v603 = vmax.f32 %v481, 0.0
    %v604 = vmax.f32 %v486, 0.0
    %v605 = vmax.f32 %v491, 0.0
    %v606 = vmax.f32 %v496, 0.0
    %v607 = vmax.f32 %v501, 0.0
    %v608 = vmax.f32 %v506, 0.0
    %v609 = vmax.f32 %v511, 0.0
    %v610 = vmax.f32 %v516, 0.0
    %v611 = vmax.f32 %v521, 0.0
    %v612 = vmax.f32 %v526, 0.0
    %v613 = vmax.f32 %v531, 0.0
    %v614 = vmax.f32 %v536, 0.0
    %v615 = vmax.f32 %v541, 0.0
    %v616 = vmax.f32 %v546, 0.0
    %v617 = vmax.f32 %v551, 0.0
    %v618 = vmax.f32 %v556, 0.0
    %v619 = vmax.f32 %v561, 0.0
    %v620 = vmax.f32 %v566, 0.0
    %v621 = vmax.f32 %v571, 0.0
    %v622 = vmax.f32 %v576, 0.0
    %v623 = vmax.f32 %v581, 0.0
    %v624 = vmax.f32 %v586, 0.0
    %v625 = vmax.f32 %v591, 0.0
    %v626 = vld [vmem:[%s3] sm:$0xff]
    %v627 = vld [vmem:[%s3 + $0x8] sm:$0xff]
    %v628 = vld [vmem:[%s3 + $0x10] sm:$0xff]
    %v629 = vld [vmem:[%s3 + $0x18] sm:$0xff]
    %v630 = vld [vmem:[%s3 + $0x20] sm:$0xff]
    %v631 = vld [vmem:[%s3 + $0x28] sm:$0xff]
    %v632 = vld [vmem:[%s3 + $0x30] sm:$0xff]
    %v633 = vld [vmem:[%s3 + $0x38] sm:$0xff]
    %v634 = vld [vmem:[%s4] sm:$0xff]
    %v635 = vld [vmem:[%s4 + $0x8] sm:$0xff]
    %v636 = vld [vmem:[%s4 + $0x10] sm:$0xff]
    %v637 = vld [vmem:[%s4 + $0x18] sm:$0xff]
    %639 = vset.pattern.permute.xlu0 0
    %640 = vperm.xlu0 %639, %v634
    %v641 = vpop.permute.xlu0 %640
    %644 = vset.pattern.permute.xlu0 0
    %645 = vperm.xlu0 %644, %v635
    %v646 = vpop.permute.xlu0 %645
    %649 = vset.pattern.permute.xlu0 0
    %650 = vperm.xlu0 %649, %v636
    %v651 = vpop.permute.xlu0 %650
    %654 = vset.pattern.permute.xlu0 0
    %655 = vperm.xlu0 %654, %v637
    %v656 = vpop.permute.xlu0 %655
    %658 = vmatprep.subr.mxu0 0.0
    %659 = vmatpush1.msra.mxu0 %v594
    %660 = vmatprep.subr.mxu0 0.0
    %661 = vmatpush1.msra.mxu0 %v595
    %662 = vmatprep.subr.mxu0 0.0
    %663 = vmatpush1.msra.mxu0 %v596
    %664 = vmatprep.subr.mxu0 0.0
    %665 = vmatpush1.msra.mxu0 %v597
    %666 = vmatprep.subr.mxu0 0.0
    %667 = vmatpush1.msra.mxu0 %v598
    %668 = vmatprep.subr.mxu0 0.0
    %669 = vmatpush1.msra.mxu0 %v599
    %670 = vmatprep.subr.mxu0 0.0
    %671 = vmatpush1.msra.mxu0 %v600
    %672 = vmatprep.subr.mxu0 0.0
    %673 = vmatpush1.msra.mxu0 %v601
    %674 = vmatprep.subr.mxu0 0.0
    %675 = vmatpush1.msra.mxu0 %v602
    %676 = vmatprep.subr.mxu0 0.0
    %677 = vmatpush1.msra.mxu0 %v603
    %678 = vmatprep.subr.mxu0 0.0
    %679 = vmatpush1.msra.mxu0 %v604
    %680 = vmatprep.subr.mxu0 0.0
    %681 = vmatpush1.msra.mxu0 %v605
    %682 = vmatprep.subr.mxu0 0.0
    %683 = vmatpush1.msra.mxu0 %v606
    %684 = vmatprep.subr.mxu0 0.0
    %685 = vmatpush1.msra.mxu0 %v607
    %686 = vmatprep.subr.mxu0 0.0
    %687 = vmatpush1.msra.mxu0 %v608
    %688 = vmatprep.subr.mxu0 0.0
    %689 = vmatpush1.msra.mxu0 %v609
    %690 = vmatprep.subr.mxu0 0.0
    %691 = vmatpush1.msra.mxu0 %v610
    %692 = vmatprep.subr.mxu0 0.0
    %693 = vmatpush1.msra.mxu0 %v611
    %694 = vmatprep.subr.mxu0 0.0
    %695 = vmatpush1.msra.mxu0 %v612
    %696 = vmatprep.subr.mxu0 0.0
    %697 = vmatpush1.msra.mxu0 %v613
    %698 = vmatprep.subr.mxu0 0.0
    %699 = vmatpush1.msra.mxu0 %v614
    %700 = vmatprep.subr.mxu0 0.0
    %701 = vmatpush1.msra.mxu0 %v615
    %702 = vmatprep.subr.mxu0 0.0
    %703 = vmatpush1.msra.mxu0 %v616
    %704 = vmatprep.subr.mxu0 0.0
    %705 = vmatpush1.msra.mxu0 %v617
    %706 = vmatprep.subr.mxu0 0.0
    %707 = vmatpush1.msra.mxu0 %v618
    %708 = vmatprep.subr.mxu0 0.0
    %709 = vmatpush1.msra.mxu0 %v619
    %710 = vmatprep.subr.mxu0 0.0
    %711 = vmatpush1.msra.mxu0 %v620
    %712 = vmatprep.subr.mxu0 0.0
    %713 = vmatpush1.msra.mxu0 %v621
    %714 = vmatprep.subr.mxu0 0.0
    %715 = vmatpush1.msra.mxu0 %v622
    %716 = vmatprep.subr.mxu0 0.0
    %717 = vmatpush1.msra.mxu0 %v623
    %718 = vmatprep.subr.mxu0 0.0
    %719 = vmatpush1.msra.mxu0 %v624
    %720 = vmatprep.subr.mxu0 0.0
    %721 = vmatpush1.msra.mxu0 %v625
    %722 = vmatprep.mubr.f32.mxu0 %v627
    %723 = vmatmul.mubr.f32.gmra.mrb[0].mxu0 %v626
    %v724 = vpop.f32.mrb[0].mxu0
    %v725 = vadd.f32 %v641, %v724
    %v726 = vpop.f32.mrb[0].mxu0
    %727 = vmatprep.mubr.f32.mxu0 %v629
    %728 = vmatmul.mubr.f32.gmra.mrb[0].mxu0 %v628
    %v729 = vpop.f32.mrb[0].mxu0
    %v730 = vadd.f32 %v646, %v729
    %v731 = vpop.f32.mrb[0].mxu0
    %732 = vmatprep.mubr.f32.mxu0 %v631
    %733 = vmatmul.mubr.f32.gmra.mrb[0].mxu0 %v630
    %v734 = vpop.f32.mrb[0].mxu0
    %v735 = vadd.f32 %v651, %v734
    %v736 = vpop.f32.mrb[0].mxu0
    %737 = vmatprep.mubr.f32.mxu0 %v633
    %738 = vmatmul.mubr.f32.gmra.mrb[0].mxu0 %v632
    %v739 = vpop.f32.mrb[0].mxu0
    %v740 = vadd.f32 %v656, %v739
    %v741 = vpop.f32.mrb[0].mxu0
    %742 = vdwg.mxu0
    %v743 = vmax.f32 %v725, 0.0
    %v744 = vmax.f32 %v730, 0.0
    %v745 = vmax.f32 %v735, 0.0
    %v746 = vmax.f32 %v740, 0.0
    %v747 = vld [vmem:[%s5] sm:$0xff]
    %v748 = vld [vmem:[%s5 + $0x8] sm:$0xff]
    %v749 = vld [vmem:[%s6] sm:$0xff]
    %v750 = vld [vmem:[%s6 + $0x8] sm:$0xff]
    %752 = vset.pattern.permute.xlu0 0
    %753 = vperm.xlu0 %752, %v749
    %v754 = vpop.permute.xlu0 %753
    %757 = vset.pattern.permute.xlu0 0
    %758 = vperm.xlu0 %757, %v750
    %v759 = vpop.permute.xlu0 %758
    %vm761 = vcmask 261120
    %v763 = vsel %vm761, %v747, 0
    %v766 = vsel %vm761, %v748, 0
    %768 = vmatprep.subr.mxu0 0.0
    %769 = vmatpush1.msra.mxu0 %v743
    %770 = vmatprep.subr.mxu0 0.0
    %771 = vmatpush1.msra.mxu0 %v744
    %772 = vmatprep.subr.mxu0 0.0
    %773 = vmatpush1.msra.mxu0 %v745
    %774 = vmatprep.subr.mxu0 0.0
    %775 = vmatpush1.msra.mxu0 %v746
    %776 = vmatprep.subr.mxu0 0.0
    %777 = vmatpush1.msra.mxu0 0.0
    %778 = vmatprep.subr.mxu0 0.0
    %779 = vmatpush1.msra.mxu0 0.0
    %780 = vmatprep.subr.mxu0 0.0
    %781 = vmatpush1.msra.mxu0 0.0
    %782 = vmatprep.subr.mxu0 0.0
    %783 = vmatpush1.msra.mxu0 0.0
    %784 = vmatprep.subr.mxu0 0.0
    %785 = vmatpush1.msra.mxu0 0.0
    %786 = vmatprep.subr.mxu0 0.0
    %787 = vmatpush1.msra.mxu0 0.0
    %788 = vmatprep.subr.mxu0 0.0
    %789 = vmatpush1.msra.mxu0 0.0
    %790 = vmatprep.subr.mxu0 0.0
    %791 = vmatpush1.msra.mxu0 0.0
    %792 = vmatprep.subr.mxu0 0.0
    %793 = vmatpush1.msra.mxu0 0.0
    %794 = vmatprep.subr.mxu0 0.0
    %795 = vmatpush1.msra.mxu0 0.0
    %796 = vmatprep.subr.mxu0 0.0
    %797 = vmatpush1.msra.mxu0 0.0
    %798 = vmatprep.subr.mxu0 0.0
    %799 = vmatpush1.msra.mxu0 0.0
    %800 = vmatprep.subr.mxu0 0.0
    %801 = vmatpush1.msra.mxu0 0.0
    %802 = vmatprep.subr.mxu0 0.0
    %803 = vmatpush1.msra.mxu0 0.0
    %804 = vmatprep.subr.mxu0 0.0
    %805 = vmatpush1.msra.mxu0 0.0
    %806 = vmatprep.subr.mxu0 0.0
    %807 = vmatpush1.msra.mxu0 0.0
    %808 = vmatprep.subr.mxu0 0.0
    %809 = vmatpush1.msra.mxu0 0.0
    %810 = vmatprep.subr.mxu0 0.0
    %811 = vmatpush1.msra.mxu0 0.0
    %812 = vmatprep.subr.mxu0 0.0
    %813 = vmatpush1.msra.mxu0 0.0
    %814 = vmatprep.subr.mxu0 0.0
    %815 = vmatpush1.msra.mxu0 0.0
    %816 = vmatprep.subr.mxu0 0.0
    %817 = vmatpush1.msra.mxu0 0.0
    %818 = vmatprep.subr.mxu0 0.0
    %819 = vmatpush1.msra.mxu0 0.0
    %820 = vmatprep.subr.mxu0 0.0
    %821 = vmatpush1.msra.mxu0 0.0
    %822 = vmatprep.subr.mxu0 0.0
    %823 = vmatpush1.msra.mxu0 0.0
    %824 = vmatprep.subr.mxu0 0.0
    %825 = vmatpush1.msra.mxu0 0.0
    %826 = vmatprep.subr.mxu0 0.0
    %827 = vmatpush1.msra.mxu0 0.0
    %828 = vmatprep.subr.mxu0 0.0
    %829 = vmatpush1.msra.mxu0 0.0
    %830 = vmatprep.subr.mxu0 0.0
    %831 = vmatpush1.msra.mxu0 0.0
    %832 = vmatprep.mubr.f32.mxu0 0.0
    %833 = vmatmul.mubr.f32.gmra.mrb[0].mxu0 %v763
    %v834 = vpop.f32.mrb[0].mxu0
    %v835 = vadd.f32 %v754, %v834
    %v836 = vpop.f32.mrb[0].mxu0
    %837 = vmatprep.mubr.f32.mxu0 0.0
    %838 = vmatmul.mubr.f32.gmra.mrb[0].mxu0 %v766
    %v839 = vpop.f32.mrb[0].mxu0
    %v840 = vadd.f32 %v759, %v839
    %v841 = vpop.f32.mrb[0].mxu0
    %842 = vdwg.mxu0
    %v843 = vmax.f32 %v835, 0.0
    %v844 = vmax.f32 %v840, 0.0
    %v845 = vld [vmem:[%s7] sm:$0xff]
    %v846 = vld [vmem:[%s8] sm:$0xff]
    %848 = vset.pattern.permute.xlu0 0
    %849 = vperm.xlu0 %848, %v846
    %v850 = vpop.permute.xlu0 %849
    %vm852 = vcmask 130048
    %v854 = vsel %vm852, %v845, 0
    %856 = vmatprep.subr.mxu0 0.0
    %857 = vmatpush1.msra.mxu0 %v843
    %858 = vmatprep.subr.mxu0 0.0
    %859 = vmatpush1.msra.mxu0 %v844
    %860 = vmatprep.subr.mxu0 0.0
    %861 = vmatpush1.msra.mxu0 0.0
    %862 = vmatprep.subr.mxu0 0.0
    %863 = vmatpush1.msra.mxu0 0.0
    %864 = vmatprep.subr.mxu0 0.0
    %865 = vmatpush1.msra.mxu0 0.0
    %866 = vmatprep.subr.mxu0 0.0
    %867 = vmatpush1.msra.mxu0 0.0
    %868 = vmatprep.subr.mxu0 0.0
    %869 = vmatpush1.msra.mxu0 0.0
    %870 = vmatprep.subr.mxu0 0.0
    %871 = vmatpush1.msra.mxu0 0.0
    %872 = vmatprep.subr.mxu0 0.0
    %873 = vmatpush1.msra.mxu0 0.0
    %874 = vmatprep.subr.mxu0 0.0
    %875 = vmatpush1.msra.mxu0 0.0
    %876 = vmatprep.subr.mxu0 0.0
    %877 = vmatpush1.msra.mxu0 0.0
    %878 = vmatprep.subr.mxu0 0.0
    %879 = vmatpush1.msra.mxu0 0.0
    %880 = vmatprep.subr.mxu0 0.0
    %881 = vmatpush1.msra.mxu0 0.0
    %882 = vmatprep.subr.mxu0 0.0
    %883 = vmatpush1.msra.mxu0 0.0
    %884 = vmatprep.subr.mxu0 0.0
    %885 = vmatpush1.msra.mxu0 0.0
    %886 = vmatprep.subr.mxu0 0.0
    %887 = vmatpush1.msra.mxu0 0.0
    %888 = vmatprep.subr.mxu0 0.0
    %889 = vmatpush1.msra.mxu0 0.0
    %890 = vmatprep.subr.mxu0 0.0
    %891 = vmatpush1.msra.mxu0 0.0
    %892 = vmatprep.subr.mxu0 0.0
    %893 = vmatpush1.msra.mxu0 0.0
    %894 = vmatprep.subr.mxu0 0.0
    %895 = vmatpush1.msra.mxu0 0.0
    %896 = vmatprep.subr.mxu0 0.0
    %897 = vmatpush1.msra.mxu0 0.0
    %898 = vmatprep.subr.mxu0 0.0
    %899 = vmatpush1.msra.mxu0 0.0
    %900 = vmatprep.subr.mxu0 0.0
    %901 = vmatpush1.msra.mxu0 0.0
    %902 = vmatprep.subr.mxu0 0.0
    %903 = vmatpush1.msra.mxu0 0.0
    %904 = vmatprep.subr.mxu0 0.0
    %905 = vmatpush1.msra.mxu0 0.0
    %906 = vmatprep.subr.mxu0 0.0
    %907 = vmatpush1.msra.mxu0 0.0
    %908 = vmatprep.subr.mxu0 0.0
    %909 = vmatpush1.msra.mxu0 0.0
    %910 = vmatprep.subr.mxu0 0.0
    %911 = vmatpush1.msra.mxu0 0.0
    %912 = vmatprep.subr.mxu0 0.0
    %913 = vmatpush1.msra.mxu0 0.0
    %914 = vmatprep.subr.mxu0 0.0
    %915 = vmatpush1.msra.mxu0 0.0
    %916 = vmatprep.subr.mxu0 0.0
    %917 = vmatpush1.msra.mxu0 0.0
    %918 = vmatprep.subr.mxu0 0.0
    %919 = vmatpush1.msra.mxu0 0.0
    %920 = vmatprep.mubr.f32.mxu0 0.0
    %921 = vmatmul.mubr.f32.gmra.mrb[0].mxu0 %v854
    %v922 = vpop.f32.mrb[0].mxu0
    %v923 = vadd.f32 %v850, %v922
    %v924 = vpop.f32.mrb[0].mxu0
    %925 = vdwg.mxu0
    %v926 = vmax.f32 %v923, 0.0
    %v927 = vld [vmem:[%s9] sm:$0xf]
    %v928 = vld [vmem:[%s10] sm:$0xf]
    %930 = vset.pattern.permute.xlu0 0
    %931 = vperm.xlu0 %930, %v928
    %v932 = vpop.permute.xlu0 %931
    %v935 = vsel %vm272, %v927, 0
    %937 = vmatprep.subr.mxu0 0.0
    %938 = vmatpush1.msra.mxu0 %v926
    %939 = vmatprep.subr.mxu0 0.0
    %940 = vmatpush1.msra.mxu0 0.0
    %941 = vmatprep.subr.mxu0 0.0
    %942 = vmatpush1.msra.mxu0 0.0
    %943 = vmatprep.subr.mxu0 0.0
    %944 = vmatpush1.msra.mxu0 0.0
    %945 = vmatprep.subr.mxu0 0.0
    %946 = vmatpush1.msra.mxu0 0.0
    %947 = vmatprep.subr.mxu0 0.0
    %948 = vmatpush1.msra.mxu0 0.0
    %949 = vmatprep.subr.mxu0 0.0
    %950 = vmatpush1.msra.mxu0 0.0
    %951 = vmatprep.subr.mxu0 0.0
    %952 = vmatpush1.msra.mxu0 0.0
    %953 = vmatprep.subr.mxu0 0.0
    %954 = vmatpush1.msra.mxu0 0.0
    %955 = vmatprep.subr.mxu0 0.0
    %956 = vmatpush1.msra.mxu0 0.0
    %957 = vmatprep.subr.mxu0 0.0
    %958 = vmatpush1.msra.mxu0 0.0
    %959 = vmatprep.subr.mxu0 0.0
    %960 = vmatpush1.msra.mxu0 0.0
    %961 = vmatprep.subr.mxu0 0.0
    %962 = vmatpush1.msra.mxu0 0.0
    %963 = vmatprep.subr.mxu0 0.0
    %964 = vmatpush1.msra.mxu0 0.0
    %965 = vmatprep.subr.mxu0 0.0
    %966 = vmatpush1.msra.mxu0 0.0
    %967 = vmatprep.subr.mxu0 0.0
    %968 = vmatpush1.msra.mxu0 0.0
    %969 = vmatprep.subr.mxu0 0.0
    %970 = vmatpush1.msra.mxu0 0.0
    %971 = vmatprep.subr.mxu0 0.0
    %972 = vmatpush1.msra.mxu0 0.0
    %973 = vmatprep.subr.mxu0 0.0
    %974 = vmatpush1.msra.mxu0 0.0
    %975 = vmatprep.subr.mxu0 0.0
    %976 = vmatpush1.msra.mxu0 0.0
    %977 = vmatprep.subr.mxu0 0.0
    %978 = vmatpush1.msra.mxu0 0.0
    %979 = vmatprep.subr.mxu0 0.0
    %980 = vmatpush1.msra.mxu0 0.0
    %981 = vmatprep.subr.mxu0 0.0
    %982 = vmatpush1.msra.mxu0 0.0
    %983 = vmatprep.subr.mxu0 0.0
    %984 = vmatpush1.msra.mxu0 0.0
    %985 = vmatprep.subr.mxu0 0.0
    %986 = vmatpush1.msra.mxu0 0.0
    %987 = vmatprep.subr.mxu0 0.0
    %988 = vmatpush1.msra.mxu0 0.0
    %989 = vmatprep.subr.mxu0 0.0
    %990 = vmatpush1.msra.mxu0 0.0
    %991 = vmatprep.subr.mxu0 0.0
    %992 = vmatpush1.msra.mxu0 0.0
    %993 = vmatprep.subr.mxu0 0.0
    %994 = vmatpush1.msra.mxu0 0.0
    %995 = vmatprep.subr.mxu0 0.0
    %996 = vmatpush1.msra.mxu0 0.0
    %997 = vmatprep.subr.mxu0 0.0
    %998 = vmatpush1.msra.mxu0 0.0
    %999 = vmatprep.subr.mxu0 0.0
    %1000 = vmatpush1.msra.mxu0 0.0
    %1001 = vmatprep.mubr.f32.mxu0 0.0
    %1002 = vmatmul.mubr.f32.gmra.mrb[0].mxu0 %v935
    %v1003 = vpop.f32.mrb[0].mxu0
    %v1004 = vadd.f32 %v932, %v1003
    %v1005 = vpop.f32.mrb[0].mxu0
    %1006 = vdwg.mxu0
    %v1007 = vmax.f32 %v1004, 0.0
    %v1008 = vld [vmem:[%s11] sm:$0x1]
    %v1009 = vld [vmem:[#allocation2] sm:$0x1]
    %1011 = vset.pattern.permute.xlu0 0
    %1012 = vperm.xlu0 %1011, %v1009
    %v1013 = vpop.permute.xlu0 %1012
    %v1015 = vlaneseq
    %v1016 = vshrl.u32 %v1015, 7
    %v1017 = vsub.s32 0, %v1016
    %v1018 = vrot.slane %v1013, %v1017
    %vm1019 = vcmask 31744
    %v1021 = vsel %vm1019, %v1008, 0
    %vm1023 = vcmask 1043456
    %v1025 = vsel %vm1023, %v1007, 0
    %1027 = vmatprep.subr.mxu0 0.0
    %1028 = vmatpush1.msra.mxu0 %v1025
    %1029 = vmatprep.subr.mxu0 0.0
    %1030 = vmatpush1.msra.mxu0 0.0
    %1031 = vmatprep.subr.mxu0 0.0
    %1032 = vmatpush1.msra.mxu0 0.0
    %1033 = vmatprep.subr.mxu0 0.0
    %1034 = vmatpush1.msra.mxu0 0.0
    %1035 = vmatprep.subr.mxu0 0.0
    %1036 = vmatpush1.msra.mxu0 0.0
    %1037 = vmatprep.subr.mxu0 0.0
    %1038 = vmatpush1.msra.mxu0 0.0
    %1039 = vmatprep.subr.mxu0 0.0
    %1040 = vmatpush1.msra.mxu0 0.0
    %1041 = vmatprep.subr.mxu0 0.0
    %1042 = vmatpush1.msra.mxu0 0.0
    %1043 = vmatprep.subr.mxu0 0.0
    %1044 = vmatpush1.msra.mxu0 0.0
    %1045 = vmatprep.subr.mxu0 0.0
    %1046 = vmatpush1.msra.mxu0 0.0
    %1047 = vmatprep.subr.mxu0 0.0
    %1048 = vmatpush1.msra.mxu0 0.0
    %1049 = vmatprep.subr.mxu0 0.0
    %1050 = vmatpush1.msra.mxu0 0.0
    %1051 = vmatprep.subr.mxu0 0.0
    %1052 = vmatpush1.msra.mxu0 0.0
    %1053 = vmatprep.subr.mxu0 0.0
    %1054 = vmatpush1.msra.mxu0 0.0
    %1055 = vmatprep.subr.mxu0 0.0
    %1056 = vmatpush1.msra.mxu0 0.0
    %1057 = vmatprep.subr.mxu0 0.0
    %1058 = vmatpush1.msra.mxu0 0.0
    %1059 = vmatprep.subr.mxu0 0.0
    %1060 = vmatpush1.msra.mxu0 0.0
    %1061 = vmatprep.subr.mxu0 0.0
    %1062 = vmatpush1.msra.mxu0 0.0
    %1063 = vmatprep.subr.mxu0 0.0
    %1064 = vmatpush1.msra.mxu0 0.0
    %1065 = vmatprep.subr.mxu0 0.0
    %1066 = vmatpush1.msra.mxu0 0.0
    %1067 = vmatprep.subr.mxu0 0.0
    %1068 = vmatpush1.msra.mxu0 0.0
    %1069 = vmatprep.subr.mxu0 0.0
    %1070 = vmatpush1.msra.mxu0 0.0
    %1071 = vmatprep.subr.mxu0 0.0
    %1072 = vmatpush1.msra.mxu0 0.0
    %1073 = vmatprep.subr.mxu0 0.0
    %1074 = vmatpush1.msra.mxu0 0.0
    %1075 = vmatprep.subr.mxu0 0.0
    %1076 = vmatpush1.msra.mxu0 0.0
    %1077 = vmatprep.subr.mxu0 0.0
    %1078 = vmatpush1.msra.mxu0 0.0
    %1079 = vmatprep.subr.mxu0 0.0
    %1080 = vmatpush1.msra.mxu0 0.0
    %1081 = vmatprep.subr.mxu0 0.0
    %1082 = vmatpush1.msra.mxu0 0.0
    %1083 = vmatprep.subr.mxu0 0.0
    %1084 = vmatpush1.msra.mxu0 0.0
    %1085 = vmatprep.subr.mxu0 0.0
    %1086 = vmatpush1.msra.mxu0 0.0
    %1087 = vmatprep.subr.mxu0 0.0
    %1088 = vmatpush1.msra.mxu0 0.0
    %1089 = vmatprep.subr.mxu0 0.0
    %1090 = vmatpush1.msra.mxu0 0.0
    %1091 = vmatprep.mubr.f32.mxu0 0.0
    %1092 = vmatmul.mubr.f32.gmra.mrb[0].mxu0 %v1021
    %v1093 = vpop.f32.mrb[0].mxu0
    %v1094 = vadd.f32 %v1018, %v1093
    %v1095 = vpop.f32.mrb[0].mxu0
    %1096 = vdwg.mxu0
    %1097 = vst [vmem:[#allocation3] sm:$0x1] %v1094
    // Predicated region
    $region54: #{tpu_custom_call.1} parent=1 // pred_check
      _
    $region55: #{tpu_custom_call.1} parent=1 // pred_check_branch
      %1099 = sbr.rel (0) target = $region57
    $region56: #{tpu_custom_call.1} parent=1 // pred_region
      %s1101 = ssub.s32 16, 16
      %1102 = vsyncadd [#allocation4], %s1101
      %s1104 = sshll.u32 [#allocation3], 4
      %s1105 = int_to_ptr.vmem [resolvable:$true] %s1104
      %1107 = dma.vmem_to_hbm [thread:$0]  %s1105, 16, %s13, [#allocation4]
    $region57: #{tpu_custom_call.1} parent=1 // pred_fallthru
      _
    // Predicated region
    $region58: #{tpu_custom_call.1} parent=1 // pred_check
      _
    $region59: #{tpu_custom_call.1} parent=1 // pred_check_branch
      %1109 = sbr.rel (0) target = $region61
    $region60: #{tpu_custom_call.1} parent=1 // pred_region
      %1110 = dma.done [#allocation4], 16
    $region61: #{tpu_custom_call.1} parent=1 // pred_fallthru
      _
    %1111 = vsyncpa [#allocation4], 1

</llo_original>
